<compile_context>
chip_gen: v6e
topology: v6e:2x2x1
jax: 0.10.0
libtpu: 0.0.40
codegen_flags: <defaults>
</compile_context>

<pallas_src>
import functools

import numpy as np
import jax
import jax.numpy as jnp
from jax.experimental import pallas as pl
from jax.experimental.pallas import tpu as pltpu


# ---------------------------------------------------------------------------
# helpers
# ---------------------------------------------------------------------------
def _round_up(x, m):
    return ((x + m - 1) // m) * m


def _pick_block(padded_dim, candidates):
    for c in candidates:
        if c <= padded_dim and padded_dim % c == 0:
            return c
    return min(padded_dim, 128)   # padded dims are always multiples of 128


# ---------------------------------------------------------------------------
# fused kernel:  out = x @ W^T + x @ (A @ B) + bias
# ---------------------------------------------------------------------------
def _fused_fourier_linear_kernel(bk, x_ref, w_ref, a_ref, b_ref, bias_ref,
                                 o_ref, acc_ref, p_ref):
    """One (i, j, k) grid step.

    x_ref    (bm, bk)   activations tile                 (compute dtype)
    w_ref    (bn, bk)   base weight tile, native (N, K)  (compute dtype)
    a_ref    (Kp, NF)   adapter factor A, VMEM-resident  (compute dtype)
    b_ref    (NF, bn)   adapter factor B tile            (f32)
    bias_ref (1,  bn)   bias tile                        (f32)
    o_ref    (bm, bn)   output tile                      (previous dtype)
    acc_ref  (bm, bn)   f32 accumulator  (x @ W^T)
    p_ref    (bm, NF)   f32 accumulator  (x @ A)
    """
    k = pl.program_id(2)

    @pl.when(k == 0)
    def _():
        acc_ref[...] = jnp.zeros_like(acc_ref)
        p_ref[...] = jnp.zeros_like(p_ref)

    x = x_ref[...]

    # base: x @ W^T  -- contract the last dim of both operands ('NT' matmul).
    acc_ref[...] += jax.lax.dot_general(
        x, w_ref[...], (((1,), (1,)), ((), ())),
        preferred_element_type=jnp.float32)

    # adapter partial sums: p += x @ A[k*bk:(k+1)*bk, :]   (A resident in VMEM)
    a_blk = a_ref[pl.ds(pl.multiple_of(k * bk, bk), bk), :]
    p_ref[...] += jnp.dot(x, a_blk, preferred_element_type=jnp.float32)

    @pl.when(k == pl.num_programs(2) - 1)
    def _():
        delta = jnp.dot(p_ref[...], b_ref[...],
                        preferred_element_type=jnp.float32)
        o_ref[...] = (acc_ref[...] + delta + bias_ref[...]).astype(o_ref.dtype)


# ---------------------------------------------------------------------------
# wrapper
# ---------------------------------------------------------------------------
def fourier_linear_forward(x, weight, bias, spectrum, idx0, idx1, c_mat, scale,
                           *, block_m=512, block_n=512, block_k=None,
                           compute_dtype=None):
    """Fused base-linear + Fourier-adapter forward.

    x: (B, S, K); weight: (N, K); bias: (N,); spectrum: (nf,);
    idx0/idx1: (nf,) int32 spectral indices; c_mat: (K, K) IDCT matrix such
    that idct(v, norm=None) along the last dim == v @ c_mat.  Requires N == K.

    compute_dtype: dtype fed to the MXU (default: x.dtype).  Pass jnp.bfloat16
    with f32 inputs for native-rate MXU matmuls with f32 accumulation.
    """
    previous_dtype = x.dtype
    B, S, K = x.shape
    N, K_w = weight.shape
    assert K_w == K, "weight / in_features mismatch"
    assert N == K, "Fourier adapter requires out_features == in_features"
    assert bias.shape == (N,)
    nf = spectrum.shape[0]

    compute_dtype = jnp.dtype(compute_dtype or x.dtype)
    itemsize = compute_dtype.itemsize
    M = B * S

    # ---- tile / padding choices -------------------------------------------
    if block_k is None:
        block_k = 1024 if itemsize <= 2 else 512
    pack = 8 * max(1, 4 // itemsize)       # sublane packing: f32 8, bf16 16, i8 32
    bm = block_m if M >= block_m else min(block_m, _round_up(M, pack))
    Mp = _round_up(M, bm)
    Np = _round_up(N, 128)
    Kp = _round_up(K, 128)
    NF = max(128, _round_up(nf, 128))      # lane-dense adapter rank (pad with zeros)

    bn = _pick_block(Np, (block_n, 512, 256, 128))
    if Mp // bm == 1 and Np // bn < 2 and Np >= 256:
        # v7x shards only the 'parallel' grid axes across its 2 TensorCores;
        # make sure decode-like shapes still expose >= 2 parallel blocks.
        bn = _pick_block(Np, tuple(c for c in (512, 256, 128) if 2 * c <= Np))
    bk = _pick_block(Kp, (block_k, 512, 256, 128))
    gm, gn, gk = Mp // bm, Np // bn, Kp // bk

    # ---- operand prep (cheap XLA glue; A/B depend only on the parameters) --
    cs = spectrum.astype(jnp.float32) * jnp.float32(scale)
    a_mat = (c_mat[idx0, :].astype(jnp.float32) * cs[:, None]).T        # (K, nf)
    b_mat = c_mat[idx1, :].astype(jnp.float32)                          # (nf, N)
    a_mat = jnp.pad(a_mat, ((0, Kp - K), (0, NF - nf))).astype(compute_dtype)
    b_mat = jnp.pad(b_mat, ((0, NF - nf), (0, Np - N)))                 # stays f32

    x2d = jnp.pad(x.reshape(M, K).astype(compute_dtype),
                  ((0, Mp - M), (0, Kp - K)))
    w_pad = jnp.pad(weight.astype(compute_dtype), ((0, Np - N), (0, Kp - K)))
    bias2d = jnp.pad(bias.astype(jnp.float32).reshape(1, N),
                     ((0, 0), (0, Np - N)))

    # ---- cost estimate reflecting the real streaming pattern ---------------
    out_item = jnp.dtype(previous_dtype).itemsize
    cost = pl.CostEstimate(
        flops=2 * Mp * Kp * Np + 2 * Mp * Kp * NF * gn + 2 * Mp * NF * Np,
        transcendentals=0,
        bytes_accessed=(Mp * Kp * itemsize) * gn      # x: once per N tile
                       + (Np * Kp * itemsize) * gm    # W: once per M tile
                       + Kp * NF * itemsize           # A: resident, read once
                       + (NF * Np * 4) * gm           # B: once per M tile
                       + (Np * 4) * gm                # bias
                       + Mp * Np * out_item)          # output

    kernel = functools.partial(_fused_fourier_linear_kernel, bk)
    out2d = pl.pallas_call(
        kernel,
        out_shape=jax.ShapeDtypeStruct((Mp, Np), previous_dtype),
        grid=(gm, gn, gk),
        in_specs=[
            pl.BlockSpec((bm, bk), lambda i, j, k: (i, k)),    # x
            pl.BlockSpec((bn, bk), lambda i, j, k: (j, k)),    # W (native (N,K))
            pl.BlockSpec((Kp, NF), lambda i, j, k: (0, 0)),    # A (VMEM resident)
            pl.BlockSpec((NF, bn), lambda i, j, k: (0, j)),    # B
            pl.BlockSpec((1, bn), lambda i, j, k: (0, j)),     # bias
        ],
        out_specs=pl.BlockSpec((bm, bn), lambda i, j, k: (i, j)),
        scratch_shapes=[pltpu.VMEM((bm, bn), jnp.float32),
                        pltpu.VMEM((bm, NF), jnp.float32)],
        compiler_params=pltpu.CompilerParams(
            dimension_semantics=("parallel", "parallel", "arbitrary"),
            # ~9-16 MiB footprint at default tiles; 48 MiB gives headroom on
            # v5e/v6e (128 MiB physical) and stays below v7x's 64 MiB.
            vmem_limit_bytes=48 * 1024 * 1024),
        cost_estimate=cost,
    )(x2d, w_pad, a_mat, b_mat, bias2d)

    return out2d[:M, :N].reshape(B, S, N)


# ---------------------------------------------------------------------------
# DCT helpers (parameter / init-time glue, plain numpy)
# ---------------------------------------------------------------------------
def dct2_row_matrix(n):
    # T with torch_dct.dct_2d(W, norm=None) == T @ W @ T^T
    k = np.arange(n)[:, None]
    m = np.arange(n)[None, :]
    return 2.0 * np.cos(np.pi * k * (2 * m + 1) / (2 * n))


def idct_matrix(n):
    # C with torch_dct.idct(X, norm=None) along the last dim == X @ C
    k = np.arange(n)[:, None]
    m = np.arange(n)[None, :]
    c = np.cos(np.pi * k * (2 * m + 1) / (2 * n)) / n
    c[0, :] *= 0.5
    return c


# ---------------------------------------------------------------------------
# demo / checks
# ---------------------------------------------------------------------------
if __name__ == "__main__":
    def reference_forward(x, weight, bias, spectrum, idx0, idx1, C, scale):
        K = weight.shape[1]
        dense_s = jnp.zeros((K, K), jnp.float32).at[idx0, idx1].set(spectrum)
        delta_w = (C.T @ dense_s @ C) * scale          # idct_2d(dense_s) * scale
        xf = x.astype(jnp.float32)
        return (xf @ weight.astype(jnp.float32).T + bias.astype(jnp.float32)
                + jnp.einsum("ijk,kl->ijl", xf, delta_w))

    def make_case(seed, batch, seq, feat, nf, dtype):
        key = jax.random.PRNGKey(seed) if seed else jax.random.PRNGKey(0)
        k_w, k_b, k_x, k_s = jax.random.split(key, 4)
        weight = jax.random.normal(k_w, (feat, feat), jnp.float32) * 0.1
        bias = jax.random.normal(k_b, (feat,), jnp.float32) * 0.1
        spectrum = jax.random.normal(k_s, (nf,), jnp.float32)
        x = jax.random.normal(k_x, (batch, seq, feat), jnp.float32)
        # Deterministic spectral-index selection: top-|DCT2(W)| magnitude.
        # TODO(synk): the module's stratified/hybrid selection (energy +
        # seeded torch randperm) is host-side init logic; not reproduced.
        T = dct2_row_matrix(feat)
        w_dct = T @ np.asarray(weight) @ T.T
        flat = np.argsort(-np.abs(w_dct).reshape(-1))[:nf]
        idx0 = jnp.asarray(flat // feat, jnp.int32)
        idx1 = jnp.asarray(flat % feat, jnp.int32)
        C = jnp.asarray(idct_matrix(feat), jnp.float32)
        return (x.astype(dtype), weight.astype(dtype), bias.astype(dtype),
                spectrum, idx0, idx1, C)

    # ---- case 1: small f32, single-tile grid (module-sized demo shapes) ----
    x, w, b, s, i0, i1, C = make_case(0, 2, 8, 32, 16, jnp.float32)
    scale = 0.5 * 32   # boosted so the adapter term is well above tolerance
    out = jax.block_until_ready(
        fourier_linear_forward(x, w, b, s, i0, i1, C, scale))
    ref = reference_forward(x, w, b, s, i0, i1, C, scale)
    assert out.shape == x.shape and out.dtype == x.dtype
    np.testing.assert_allclose(np.asarray(out), np.asarray(ref),
                               atol=2e-2, rtol=2e-2)

    # ---- case 2: f32, multi-tile grid + padded-M tail (M=74 -> Mp=128) -----
    x, w, b, s, i0, i1, C = make_case(1, 2, 37, 256, 24, jnp.float32)
    scale = 0.5 * 256
    out = jax.block_until_ready(
        fourier_linear_forward(x, w, b, s, i0, i1, C, scale,
                               block_m=64, block_n=128, block_k=128))
    ref = reference_forward(x, w, b, s, i0, i1, C, scale)
    np.testing.assert_allclose(np.asarray(out), np.asarray(ref),
                               atol=2e-2, rtol=2e-2)

    # ---- case 3: bf16 inputs (adapter still applied in f32 epilogue) -------
    x, w, b, s, i0, i1, C = make_case(2, 2, 8, 128, 16, jnp.bfloat16)
    scale = 0.5 * 128
    out = jax.block_until_ready(
        fourier_linear_forward(x, w, b, s, i0, i1, C, scale))
    assert out.dtype == jnp.bfloat16
    ref = reference_forward(x, w, b, s, i0, i1, C, scale)
    np.testing.assert_allclose(np.asarray(out.astype(jnp.float32)),
                               np.asarray(ref), atol=3e-2, rtol=3e-2)

    print("KERNEL_OK")
</pallas_src>

<mosaic_0001>
module attributes {stable_mosaic.version = 11 : i64} {
  func.func @_fused_fourier_linear_kernel(%arg0: i32, %arg1: i32, %arg2: i32, %arg3: memref<16x128xf32, #tpu.memory_space<vmem>>, %arg4: memref<128x128xf32, #tpu.memory_space<vmem>>, %arg5: memref<128x128xf32, #tpu.memory_space<vmem>>, %arg6: memref<128x128xf32, #tpu.memory_space<vmem>>, %arg7: memref<1x128xf32, #tpu.memory_space<vmem>>, %arg8: memref<16x128xf32, #tpu.memory_space<vmem>>, %arg9: memref<16x128xf32, #tpu.memory_space<vmem>>, %arg10: memref<16x128xf32, #tpu.memory_space<vmem>>) attributes {dimension_semantics = [#tpu.dimension_semantics<parallel>, #tpu.dimension_semantics<parallel>, #tpu.dimension_semantics<arbitrary>], iteration_bounds = array<i64: 1, 1, 1>, scalar_prefetch = 0 : i64, scratch_operands = 2 : i64, tpu.core_type = #tpu.core_type<tc>, window_params = [{transform_indices = @transform_0, window_bounds = array<i64: 16, 128>}, {transform_indices = @transform_1, window_bounds = array<i64: 128, 128>}, {pipeline_mode = #tpu.pipeline_mode<synchronous>, transform_indices = @transform_2, window_bounds = array<i64: 128, 128>}, {transform_indices = @transform_3, window_bounds = array<i64: 128, 128>}, {transform_indices = @transform_4, window_bounds = array<i64: 1, 128>}, {transform_indices = @transform_5, window_bounds = array<i64: 16, 128>}]} {
    %c0_i32 = arith.constant 0 : i32
    %0 = arith.cmpi eq, %arg2, %c0_i32 : i32
    %1 = arith.extui %0 : i1 to i32
    %c0_i32_0 = arith.constant 0 : i32
    %2 = arith.cmpi ne, %1, %c0_i32_0 : i32
    scf.if %2 {
      %cst_16 = arith.constant 0.000000e+00 : f32
      %20 = vector.broadcast %cst_16 : f32 to vector<16x128xf32>
      %c0_17 = arith.constant 0 : index
      %c0_18 = arith.constant 0 : index
      %21 = vector.load %arg9[%c0_17, %c0_18] : memref<16x128xf32, #tpu.memory_space<vmem>>, vector<16x128xf32>
      tpu.vector_store %arg9[%c0_17, %c0_18], %20 {strides = array<i32>} : memref<16x128xf32, #tpu.memory_space<vmem>>, vector<16x128xf32>,
      %cst_19 = arith.constant 0.000000e+00 : f32
      %22 = vector.broadcast %cst_19 : f32 to vector<16x128xf32>
      %c0_20 = arith.constant 0 : index
      %c0_21 = arith.constant 0 : index
      %23 = vector.load %arg10[%c0_20, %c0_21] : memref<16x128xf32, #tpu.memory_space<vmem>>, vector<16x128xf32>
      tpu.vector_store %arg10[%c0_20, %c0_21], %22 {strides = array<i32>} : memref<16x128xf32, #tpu.memory_space<vmem>>, vector<16x128xf32>,
    } else {
    }
    %c0 = arith.constant 0 : index
    %c0_1 = arith.constant 0 : index
    %3 = vector.load %arg3[%c0, %c0_1] : memref<16x128xf32, #tpu.memory_space<vmem>>, vector<16x128xf32>
    %c0_2 = arith.constant 0 : index
    %c0_3 = arith.constant 0 : index
    %4 = vector.load %arg9[%c0_2, %c0_3] : memref<16x128xf32, #tpu.memory_space<vmem>>, vector<16x128xf32>
    %c0_4 = arith.constant 0 : index
    %c0_5 = arith.constant 0 : index
    %5 = vector.load %arg4[%c0_4, %c0_5] : memref<128x128xf32, #tpu.memory_space<vmem>>, vector<128x128xf32>
    %cst = arith.constant dense<0.000000e+00> : vector<16x128xf32>
    %6 = tpu.matmul %3, %5, %cst {dimension_numbers = #tpu.dot_dimension_numbers<[1], [1], [0], [0], [0, 0, 1, 0], [], []>} : vector<16x128xf32>, vector<128x128xf32>, vector<16x128xf32> -> vector<16x128xf32>
    %7 = arith.addf %4, %6 : vector<16x128xf32>
    %c0_6 = arith.constant 0 : index
    %c0_7 = arith.constant 0 : index
    %8 = vector.load %arg9[%c0_6, %c0_7] : memref<16x128xf32, #tpu.memory_space<vmem>>, vector<16x128xf32>
    tpu.vector_store %arg9[%c0_6, %c0_7], %7 {strides = array<i32>} : memref<16x128xf32, #tpu.memory_space<vmem>>, vector<16x128xf32>,
    %c128_i32 = arith.constant 128 : i32
    %9 = arith.muli %arg2, %c128_i32 : i32
    %10 = tpu.assume_multiple %9, 128 : i32
    %11 = arith.index_cast %10 : i32 to index
    %c0_8 = arith.constant 0 : index
    %12 = vector.load %arg5[%11, %c0_8] : memref<128x128xf32, #tpu.memory_space<vmem>>, vector<128x128xf32>
    %c0_9 = arith.constant 0 : index
    %c0_10 = arith.constant 0 : index
    %13 = vector.load %arg10[%c0_9, %c0_10] : memref<16x128xf32, #tpu.memory_space<vmem>>, vector<16x128xf32>
    %cst_11 = arith.constant dense<0.000000e+00> : vector<16x128xf32>
    %14 = tpu.matmul %3, %12, %cst_11 {dimension_numbers = #tpu.dot_dimension_numbers<[1], [0], [0], [1], [0, 0, 1, 1], [], []>} : vector<16x128xf32>, vector<128x128xf32>, vector<16x128xf32> -> vector<16x128xf32>
    %15 = arith.addf %13, %14 : vector<16x128xf32>
    %c0_12 = arith.constant 0 : index
    %c0_13 = arith.constant 0 : index
    %16 = vector.load %arg10[%c0_12, %c0_13] : memref<16x128xf32, #tpu.memory_space<vmem>>, vector<16x128xf32>
    tpu.vector_store %arg10[%c0_12, %c0_13], %15 {strides = array<i32>} : memref<16x128xf32, #tpu.memory_space<vmem>>, vector<16x128xf32>,
    %c0_i32_14 = arith.constant 0 : i32
    %17 = arith.cmpi eq, %arg2, %c0_i32_14 : i32
    %18 = arith.extui %17 : i1 to i32
    %c0_i32_15 = arith.constant 0 : i32
    %19 = arith.cmpi ne, %18, %c0_i32_15 : i32
    scf.if %19 {
      %c0_16 = arith.constant 0 : index
      %c0_17 = arith.constant 0 : index
      %20 = vector.load %arg10[%c0_16, %c0_17] : memref<16x128xf32, #tpu.memory_space<vmem>>, vector<16x128xf32>
      %c0_18 = arith.constant 0 : index
      %c0_19 = arith.constant 0 : index
      %21 = vector.load %arg6[%c0_18, %c0_19] : memref<128x128xf32, #tpu.memory_space<vmem>>, vector<128x128xf32>
      %cst_20 = arith.constant dense<0.000000e+00> : vector<16x128xf32>
      %22 = tpu.matmul %20, %21, %cst_20 {dimension_numbers = #tpu.dot_dimension_numbers<[1], [0], [0], [1], [0, 0, 1, 1], [], []>} : vector<16x128xf32>, vector<128x128xf32>, vector<16x128xf32> -> vector<16x128xf32>
      %c0_21 = arith.constant 0 : index
      %c0_22 = arith.constant 0 : index
      %23 = vector.load %arg9[%c0_21, %c0_22] : memref<16x128xf32, #tpu.memory_space<vmem>>, vector<16x128xf32>
      %24 = arith.addf %23, %22 : vector<16x128xf32>
      %c0_23 = arith.constant 0 : index
      %c0_24 = arith.constant 0 : index
      %25 = vector.load %arg7[%c0_23, %c0_24] : memref<1x128xf32, #tpu.memory_space<vmem>>, vector<1x128xf32>
      %26 = vector.broadcast %25 : vector<1x128xf32> to vector<16x128xf32>
      %27 = arith.addf %24, %26 : vector<16x128xf32>
      %c0_25 = arith.constant 0 : index
      %c0_26 = arith.constant 0 : index
      %28 = vector.load %arg8[%c0_25, %c0_26] : memref<16x128xf32, #tpu.memory_space<vmem>>, vector<16x128xf32>
      tpu.vector_store %arg8[%c0_25, %c0_26], %27 {strides = array<i32>} : memref<16x128xf32, #tpu.memory_space<vmem>>, vector<16x128xf32>,
    } else {
    }
    return
  }
  func.func @transform_0(%arg0: i32, %arg1: i32, %arg2: i32) -> (i32, i32) {
    %c0_i32 = arith.constant 0 : i32
    return %arg0, %arg2 : i32, i32
  }
  func.func @transform_1(%arg0: i32, %arg1: i32, %arg2: i32) -> (i32, i32) {
    %c0_i32 = arith.constant 0 : i32
    return %arg1, %arg2 : i32, i32
  }
  func.func @transform_2(%arg0: i32, %arg1: i32, %arg2: i32) -> (i32, i32) {
    %c0_i32 = arith.constant 0 : i32
    %c0_i32_0 = arith.constant 0 : i32
    %c0_i32_1 = arith.constant 0 : i32
    return %c0_i32, %c0_i32_0 : i32, i32
  }
  func.func @transform_3(%arg0: i32, %arg1: i32, %arg2: i32) -> (i32, i32) {
    %c0_i32 = arith.constant 0 : i32
    %c0_i32_0 = arith.constant 0 : i32
    return %c0_i32, %arg1 : i32, i32
  }
  func.func @transform_4(%arg0: i32, %arg1: i32, %arg2: i32) -> (i32, i32) {
    %c0_i32 = arith.constant 0 : i32
    %c0_i32_0 = arith.constant 0 : i32
    return %c0_i32, %arg1 : i32, i32
  }
  func.func @transform_5(%arg0: i32, %arg1: i32, %arg2: i32) -> (i32, i32) {
    %c0_i32 = arith.constant 0 : i32
    return %arg0, %arg1 : i32, i32
  }
}

</mosaic_0001>

<llo_original>
// kernel: tpu_custom_call.1
$region0: #{tpu_custom_call.1}
  #allocation0 [shape = 'u32[]', space=smem, size = 0x4, offset = 0x4, fixed_abs, tag = 'smem constant byte address 0x4 - core index']
  #allocation1 [shape = 'u32[144,128]{1,0:T(1,128)}', space=vmem, size = 0x12000, scoped, tag = 'internal scratch']
  #allocation2 [shape = 'f32[16,128]{1,0:T(8,128)}', space=vmem, size = 0x2000, scoped, tag = 'scratch operand']
  #allocation3 [shape = 'f32[16,128]{1,0:T(8,128)}', space=vmem, size = 0x2000, scoped, tag = 'scratch operand']
  %s0 = inlined_call_operand.hbm [shape: f32[16,128], index: 0, kind: input, shape index: {}]
  %s1 = inlined_call_operand.hbm [shape: f32[128,128], index: 1, kind: input, shape index: {}]
  %s2 = inlined_call_operand.hbm [shape: f32[128,128], index: 2, kind: input, shape index: {}]
  %s3 = inlined_call_operand.hbm [shape: f32[128,128], index: 3, kind: input, shape index: {}]
  %s4 = inlined_call_operand.vmem [shape: f32[1,128], index: 4, kind: input, shape index: {}]
  %s5 = inlined_call_operand.hbm [shape: f32[16,128], index: 5, kind: output, shape index: {}]
  %s6 = sld [smem:[#allocation0]]
  $region54: #{tpu_custom_call.1} parent=0
    _
  %s8 = ssub.s32 1, %s6
  %s9 = scalar_select 0, %s8, %s6
  $region1: #{tpu_custom_call.1} parent=0
    #allocation4 [shape = 'u8[8192]{0}', space=vmem, size = 0x2000, scoped, tag = 'input window, operand 0, single buffered']
    #allocation5 [shape = 's32[1]{0}', space=sflag, size = 0x4, scoped, tag = 'scoped memory for tpu_custom_call.1']
    #allocation6 [shape = 's32[1]{0}', space=sflag, size = 0x4, scoped, tag = 'scoped memory for tpu_custom_call.1']
    #allocation7 [shape = 'u8[65536]{0}', space=vmem, size = 0x10000, scoped, tag = 'input window, operand 1, single buffered']
    #allocation8 [shape = 's32[1]{0}', space=sflag, size = 0x4, scoped, tag = 'scoped memory for tpu_custom_call.1']
    #allocation9 [shape = 'u8[65536]{0}', space=vmem, size = 0x10000, scoped, tag = 'input window, operand 2, single buffered']
    #allocation10 [shape = 'u8[65536]{0}', space=vmem, size = 0x10000, scoped, tag = 'input window, operand 3, single buffered']
    #allocation11 [shape = 's32[1]{0}', space=sflag, size = 0x4, scoped, tag = 'scoped memory for tpu_custom_call.1']
    #allocation12 [shape = 'u8[8192]{0}', space=vmem, size = 0x2000, scoped, tag = 'output window, operand 0, single buffered']
    %10 = vsyncpa [#allocation5], 0
    %11 = vsyncpa [#allocation8], 0
    %12 = vsyncpa [#allocation11], 0
    %13 = vsyncpa [#allocation6], 0
    // Predicated region
    $region2: #{tpu_custom_call.1} parent=1 // pred_check
      _
    $region3: #{tpu_custom_call.1} parent=1 // pred_check_branch
      %15 = sbr.rel (0) target = $region5
    $region4: #{tpu_custom_call.1} parent=1 // pred_region
      %s17 = ssub.s32 256, 256
      %18 = vsyncadd [#allocation5], %s17
      %s19 = sshll.u32 [#allocation4], 4
      %s20 = int_to_ptr.vmem [resolvable:$true] %s19
      %25 = dma.hbm_to_vmem [thread:$0]  %s0, 256, %s20, [#allocation5], 128, 128, 8
    $region5: #{tpu_custom_call.1} parent=1 // pred_fallthru
      _
    // Predicated region
    $region6: #{tpu_custom_call.1} parent=1 // pred_check
      _
    $region7: #{tpu_custom_call.1} parent=1 // pred_check_branch
      %27 = sbr.rel (0) target = $region9
    $region8: #{tpu_custom_call.1} parent=1 // pred_region
      %s29 = ssub.s32 2048, 2048
      %30 = vsyncadd [#allocation8], %s29
      %s31 = sshll.u32 [#allocation7], 4
      %s32 = int_to_ptr.vmem [resolvable:$true] %s31
      %37 = dma.hbm_to_vmem [thread:$0]  %s1, 2048, %s32, [#allocation8], 128, 128, 8
    $region9: #{tpu_custom_call.1} parent=1 // pred_fallthru
      _
    // Predicated region
    $region10: #{tpu_custom_call.1} parent=1 // pred_check
      _
    $region11: #{tpu_custom_call.1} parent=1 // pred_check_branch
      %39 = sbr.rel (0) target = $region13
    $region12: #{tpu_custom_call.1} parent=1 // pred_region
      %s41 = ssub.s32 2048, 2048
      %42 = vsyncadd [#allocation8], %s41
      %s43 = sshll.u32 [#allocation9], 4
      %s44 = int_to_ptr.vmem [resolvable:$true] %s43
      %49 = dma.hbm_to_vmem [thread:$0]  %s2, 2048, %s44, [#allocation8], 128, 128, 8
    $region13: #{tpu_custom_call.1} parent=1 // pred_fallthru
      _
    // Predicated region
    $region14: #{tpu_custom_call.1} parent=1 // pred_check
      _
    $region15: #{tpu_custom_call.1} parent=1 // pred_check_branch
      %51 = sbr.rel (0) target = $region17
    $region16: #{tpu_custom_call.1} parent=1 // pred_region
      %s53 = ssub.s32 2048, 2048
      %54 = vsyncadd [#allocation11], %s53
      %s55 = sshll.u32 [#allocation10], 4
      %s56 = int_to_ptr.vmem [resolvable:$true] %s55
      %61 = dma.hbm_to_vmem [thread:$0]  %s3, 2048, %s56, [#allocation11], 128, 128, 8
    $region17: #{tpu_custom_call.1} parent=1 // pred_fallthru
      _
    // Predicated region
    $region18: #{tpu_custom_call.1} parent=1 // pred_check
      _
    $region19: #{tpu_custom_call.1} parent=1 // pred_check_branch
      %63 = sbr.rel (0) target = $region21
    $region20: #{tpu_custom_call.1} parent=1 // pred_region
      _
    $region21: #{tpu_custom_call.1} parent=1 // pred_fallthru
      _
    // Predicated region
    $region22: #{tpu_custom_call.1} parent=1 // pred_check
      _
    $region23: #{tpu_custom_call.1} parent=1 // pred_check_branch
      %65 = sbr.rel (0) target = $region25
    $region24: #{tpu_custom_call.1} parent=1 // pred_region
      %66 = dma.done [#allocation5], 256
    $region25: #{tpu_custom_call.1} parent=1 // pred_fallthru
      _
    // Predicated region
    $region26: #{tpu_custom_call.1} parent=1 // pred_check
      _
    $region27: #{tpu_custom_call.1} parent=1 // pred_check_branch
      %68 = sbr.rel (0) target = $region29
    $region28: #{tpu_custom_call.1} parent=1 // pred_region
      %69 = dma.done [#allocation8], 2048
    $region29: #{tpu_custom_call.1} parent=1 // pred_fallthru
      _
    // Predicated region
    $region30: #{tpu_custom_call.1} parent=1 // pred_check
      _
    $region31: #{tpu_custom_call.1} parent=1 // pred_check_branch
      %71 = sbr.rel (0) target = $region33
    $region32: #{tpu_custom_call.1} parent=1 // pred_region
      %72 = dma.done [#allocation8], 2048
    $region33: #{tpu_custom_call.1} parent=1 // pred_fallthru
      _
    // Predicated region
    $region34: #{tpu_custom_call.1} parent=1 // pred_check
      _
    $region35: #{tpu_custom_call.1} parent=1 // pred_check_branch
      %74 = sbr.rel (0) target = $region37
    $region36: #{tpu_custom_call.1} parent=1 // pred_region
      %75 = dma.done [#allocation11], 2048
    $region37: #{tpu_custom_call.1} parent=1 // pred_fallthru
      _
    %p76 = scmp.eq.s32.totalorder 0, 0
    // Predicated region
    $region38: #{tpu_custom_call.1} parent=1 // pred_check
      %p77 = pneg %p76
    $region39: #{tpu_custom_call.1} parent=1 // pred_check_branch
      %79 = sbr.rel (%p77) target = $region41
    $region40: #{tpu_custom_call.1} parent=1 // pred_region
      %80 = vst [vmem:[#allocation2] sm:$0xff] 0.0
      %81 = vst [vmem:[#allocation2 + $0x8] sm:$0xff] 0.0
      %82 = vst [vmem:[#allocation3] sm:$0xff] 0.0
      %83 = vst [vmem:[#allocation3 + $0x8] sm:$0xff] 0.0
    $region41: #{tpu_custom_call.1} parent=1 // pred_fallthru
      _
    %v84 = vld [vmem:[#allocation4] sm:$0xff]
    %v85 = vld [vmem:[#allocation4 + $0x8] sm:$0xff]
    %v86 = vld [vmem:[#allocation2] sm:$0xff]
    %v87 = vld [vmem:[#allocation2 + $0x8] sm:$0xff]
    %v88 = vld [vmem:[#allocation7] sm:$0xff]
    %v89 = vld [vmem:[#allocation7 + $0x8] sm:$0xff]
    %v90 = vld [vmem:[#allocation7 + $0x10] sm:$0xff]
    %v91 = vld [vmem:[#allocation7 + $0x18] sm:$0xff]
    %v92 = vld [vmem:[#allocation7 + $0x20] sm:$0xff]
    %v93 = vld [vmem:[#allocation7 + $0x28] sm:$0xff]
    %v94 = vld [vmem:[#allocation7 + $0x30] sm:$0xff]
    %v95 = vld [vmem:[#allocation7 + $0x38] sm:$0xff]
    %v96 = vld [vmem:[#allocation7 + $0x40] sm:$0xff]
    %v97 = vld [vmem:[#allocation7 + $0x48] sm:$0xff]
    %v98 = vld [vmem:[#allocation7 + $0x50] sm:$0xff]
    %v99 = vld [vmem:[#allocation7 + $0x58] sm:$0xff]
    %v100 = vld [vmem:[#allocation7 + $0x60] sm:$0xff]
    %v101 = vld [vmem:[#allocation7 + $0x68] sm:$0xff]
    %v102 = vld [vmem:[#allocation7 + $0x70] sm:$0xff]
    %v103 = vld [vmem:[#allocation7 + $0x78] sm:$0xff]
    %104 = vmatprep.subr.mxu0 0.0
    %105 = vmatpush1.xpose.msra.mxu0 %v103
    %106 = vmatprep.subr.mxu0 0.0
    %107 = vmatpush1.xpose.msra.mxu0 %v102
    %108 = vmatprep.subr.mxu0 0.0
    %109 = vmatpush1.xpose.msra.mxu0 %v101
    %110 = vmatprep.subr.mxu0 0.0
    %111 = vmatpush1.xpose.msra.mxu0 %v100
    %112 = vmatprep.subr.mxu0 0.0
    %113 = vmatpush1.xpose.msra.mxu0 %v99
    %114 = vmatprep.subr.mxu0 0.0
    %115 = vmatpush1.xpose.msra.mxu0 %v98
    %116 = vmatprep.subr.mxu0 0.0
    %117 = vmatpush1.xpose.msra.mxu0 %v97
    %118 = vmatprep.subr.mxu0 0.0
    %119 = vmatpush1.xpose.msra.mxu0 %v96
    %120 = vmatprep.subr.mxu0 0.0
    %121 = vmatpush1.xpose.msra.mxu0 %v95
    %122 = vmatprep.subr.mxu0 0.0
    %123 = vmatpush1.xpose.msra.mxu0 %v94
    %124 = vmatprep.subr.mxu0 0.0
    %125 = vmatpush1.xpose.msra.mxu0 %v93
    %126 = vmatprep.subr.mxu0 0.0
    %127 = vmatpush1.xpose.msra.mxu0 %v92
    %128 = vmatprep.subr.mxu0 0.0
    %129 = vmatpush1.xpose.msra.mxu0 %v91
    %130 = vmatprep.subr.mxu0 0.0
    %131 = vmatpush1.xpose.msra.mxu0 %v90
    %132 = vmatprep.subr.mxu0 0.0
    %133 = vmatpush1.xpose.msra.mxu0 %v89
    %134 = vmatprep.subr.mxu0 0.0
    %135 = vmatpush1.xpose.msra.mxu0 %v88
    %136 = vmatprep.subr.mxu0 0.0
    %137 = vmatpush2.xpose.msra.mxu0 0.0
    %138 = vmatprep.subr.mxu0 0.0
    %139 = vmatpush2.xpose.msra.mxu0 0.0
    %140 = vmatprep.subr.mxu0 0.0
    %141 = vmatpush2.xpose.msra.mxu0 0.0
    %142 = vmatprep.subr.mxu0 0.0
    %143 = vmatpush2.xpose.msra.mxu0 0.0
    %144 = vmatprep.subr.mxu0 0.0
    %145 = vmatpush2.xpose.msra.mxu0 0.0
    %146 = vmatprep.subr.mxu0 0.0
    %147 = vmatpush2.xpose.msra.mxu0 0.0
    %148 = vmatprep.subr.mxu0 0.0
    %149 = vmatpush2.xpose.msra.mxu0 0.0
    %150 = vmatprep.subr.mxu0 0.0
    %151 = vmatpush2.xpose.msra.mxu0 0.0
    %152 = vmatprep.subr.mxu0 0.0
    %153 = vmatpush2.xpose.msra.mxu0 0.0
    %154 = vmatprep.subr.mxu0 0.0
    %155 = vmatpush2.xpose.msra.mxu0 0.0
    %156 = vmatprep.subr.mxu0 0.0
    %157 = vmatpush2.xpose.msra.mxu0 0.0
    %158 = vmatprep.subr.mxu0 0.0
    %159 = vmatpush2.xpose.msra.mxu0 0.0
    %160 = vmatprep.subr.mxu0 0.0
    %161 = vmatpush2.xpose.msra.mxu0 0.0
    %162 = vmatprep.subr.mxu0 0.0
    %163 = vmatpush2.xpose.msra.mxu0 0.0
    %164 = vmatprep.subr.mxu0 0.0
    %165 = vmatpush2.xpose.msra.mxu0 0.0
    %166 = vmatprep.subr.mxu0 0.0
    %167 = vmatpush2.xpose.msra.mxu0 0.0
    %168 = vmatprep.mubr.f32.mxu0 0.0
    %169 = vmatmul.mubr.f32.gmra.mxu0 %v84
    %v170 = vpop.f32.mrf.mxu0
    %v171 = vadd.f32 0.0, %v170
    %v172 = vpop.f32.mrf.mxu0
    %173 = vmatprep.mubr.f32.mxu0 0.0
    %174 = vmatmul.mubr.f32.gmra.mxu0 %v85
    %v175 = vpop.f32.mrf.mxu0
    %v176 = vadd.f32 0.0, %v175
    %v177 = vpop.f32.mrf.mxu0
    %178 = vdwg.mxu0
    %v179 = vadd.f32 %v86, %v171
    %v180 = vadd.f32 %v87, %v176
    %181 = vst [vmem:[#allocation2] sm:$0xff] %v179
    %182 = vst [vmem:[#allocation2 + $0x8] sm:$0xff] %v180
    %s183 = smul.u32 0, 128
    %s184 = scalar_lea.vmem [#allocation9], %s183
    %v185 = vld [vmem:[%s184] sm:$0xff]
    %v186 = vld [vmem:[%s184 + $0x8] sm:$0xff]
    %v187 = vld [vmem:[%s184 + $0x10] sm:$0xff]
    %v188 = vld [vmem:[%s184 + $0x18] sm:$0xff]
    %v189 = vld [vmem:[%s184 + $0x20] sm:$0xff]
    %v190 = vld [vmem:[%s184 + $0x28] sm:$0xff]
    %v191 = vld [vmem:[%s184 + $0x30] sm:$0xff]
    %v192 = vld [vmem:[%s184 + $0x38] sm:$0xff]
    %v193 = vld [vmem:[%s184 + $0x40] sm:$0xff]
    %v194 = vld [vmem:[%s184 + $0x48] sm:$0xff]
    %v195 = vld [vmem:[%s184 + $0x50] sm:$0xff]
    %v196 = vld [vmem:[%s184 + $0x58] sm:$0xff]
    %v197 = vld [vmem:[%s184 + $0x60] sm:$0xff]
    %v198 = vld [vmem:[%s184 + $0x68] sm:$0xff]
    %v199 = vld [vmem:[%s184 + $0x70] sm:$0xff]
    %v200 = vld [vmem:[%s184 + $0x78] sm:$0xff]
    %v201 = vld [vmem:[#allocation3] sm:$0xff]
    %v202 = vld [vmem:[#allocation3 + $0x8] sm:$0xff]
    %203 = vmatprep.subr.mxu0 0.0
    %204 = vmatpush1.msra.mxu0 %v200
    %205 = vmatprep.subr.mxu0 0.0
    %206 = vmatpush1.msra.mxu0 %v199
    %207 = vmatprep.subr.mxu0 0.0
    %208 = vmatpush1.msra.mxu0 %v198
    %209 = vmatprep.subr.mxu0 0.0
    %210 = vmatpush1.msra.mxu0 %v197
    %211 = vmatprep.subr.mxu0 0.0
    %212 = vmatpush1.msra.mxu0 %v196
    %213 = vmatprep.subr.mxu0 0.0
    %214 = vmatpush1.msra.mxu0 %v195
    %215 = vmatprep.subr.mxu0 0.0
    %216 = vmatpush1.msra.mxu0 %v194
    %217 = vmatprep.subr.mxu0 0.0
    %218 = vmatpush1.msra.mxu0 %v193
    %219 = vmatprep.subr.mxu0 0.0
    %220 = vmatpush1.msra.mxu0 %v192
    %221 = vmatprep.subr.mxu0 0.0
    %222 = vmatpush1.msra.mxu0 %v191
    %223 = vmatprep.subr.mxu0 0.0
    %224 = vmatpush1.msra.mxu0 %v190
    %225 = vmatprep.subr.mxu0 0.0
    %226 = vmatpush1.msra.mxu0 %v189
    %227 = vmatprep.subr.mxu0 0.0
    %228 = vmatpush1.msra.mxu0 %v188
    %229 = vmatprep.subr.mxu0 0.0
    %230 = vmatpush1.msra.mxu0 %v187
    %231 = vmatprep.subr.mxu0 0.0
    %232 = vmatpush1.msra.mxu0 %v186
    %233 = vmatprep.subr.mxu0 0.0
    %234 = vmatpush1.msra.mxu0 %v185
    %235 = vmatprep.subr.mxu0 0.0
    %236 = vmatpush2.msra.mxu0 0.0
    %237 = vmatprep.subr.mxu0 0.0
    %238 = vmatpush2.msra.mxu0 0.0
    %239 = vmatprep.subr.mxu0 0.0
    %240 = vmatpush2.msra.mxu0 0.0
    %241 = vmatprep.subr.mxu0 0.0
    %242 = vmatpush2.msra.mxu0 0.0
    %243 = vmatprep.subr.mxu0 0.0
    %244 = vmatpush2.msra.mxu0 0.0
    %245 = vmatprep.subr.mxu0 0.0
    %246 = vmatpush2.msra.mxu0 0.0
    %247 = vmatprep.subr.mxu0 0.0
    %248 = vmatpush2.msra.mxu0 0.0
    %249 = vmatprep.subr.mxu0 0.0
    %250 = vmatpush2.msra.mxu0 0.0
    %251 = vmatprep.subr.mxu0 0.0
    %252 = vmatpush2.msra.mxu0 0.0
    %253 = vmatprep.subr.mxu0 0.0
    %254 = vmatpush2.msra.mxu0 0.0
    %255 = vmatprep.subr.mxu0 0.0
    %256 = vmatpush2.msra.mxu0 0.0
    %257 = vmatprep.subr.mxu0 0.0
    %258 = vmatpush2.msra.mxu0 0.0
    %259 = vmatprep.subr.mxu0 0.0
    %260 = vmatpush2.msra.mxu0 0.0
    %261 = vmatprep.subr.mxu0 0.0
    %262 = vmatpush2.msra.mxu0 0.0
    %263 = vmatprep.subr.mxu0 0.0
    %264 = vmatpush2.msra.mxu0 0.0
    %265 = vmatprep.subr.mxu0 0.0
    %266 = vmatpush2.msra.mxu0 0.0
    %267 = vmatprep.mubr.f32.mxu0 0.0
    %268 = vmatmul.mubr.f32.gmra.mxu0 %v84
    %v269 = vpop.f32.mrf.mxu0
    %v270 = vadd.f32 0.0, %v269
    %v271 = vpop.f32.mrf.mxu0
    %272 = vmatprep.mubr.f32.mxu0 0.0
    %273 = vmatmul.mubr.f32.gmra.mxu0 %v85
    %v274 = vpop.f32.mrf.mxu0
    %v275 = vadd.f32 0.0, %v274
    %v276 = vpop.f32.mrf.mxu0
    %277 = vdwg.mxu0
    %v278 = vadd.f32 %v201, %v270
    %v279 = vadd.f32 %v202, %v275
    %280 = vst [vmem:[#allocation3] sm:$0xff] %v278
    %281 = vst [vmem:[#allocation3 + $0x8] sm:$0xff] %v279
    // Predicated region
    $region42: #{tpu_custom_call.1} parent=1 // pred_check
      %p282 = pneg %p76
    $region43: #{tpu_custom_call.1} parent=1 // pred_check_branch
      %284 = sbr.rel (%p282) target = $region45
    $region44: #{tpu_custom_call.1} parent=1 // pred_region
      %v285 = vld [vmem:[#allocation3] sm:$0xff]
      %v286 = vld [vmem:[#allocation3 + $0x8] sm:$0xff]
      %v287 = vld [vmem:[#allocation10] sm:$0xff]
      %v288 = vld [vmem:[#allocation10 + $0x8] sm:$0xff]
      %v289 = vld [vmem:[#allocation10 + $0x10] sm:$0xff]
      %v290 = vld [vmem:[#allocation10 + $0x18] sm:$0xff]
      %v291 = vld [vmem:[#allocation10 + $0x20] sm:$0xff]
      %v292 = vld [vmem:[#allocation10 + $0x28] sm:$0xff]
      %v293 = vld [vmem:[#allocation10 + $0x30] sm:$0xff]
      %v294 = vld [vmem:[#allocation10 + $0x38] sm:$0xff]
      %v295 = vld [vmem:[#allocation10 + $0x40] sm:$0xff]
      %v296 = vld [vmem:[#allocation10 + $0x48] sm:$0xff]
      %v297 = vld [vmem:[#allocation10 + $0x50] sm:$0xff]
      %v298 = vld [vmem:[#allocation10 + $0x58] sm:$0xff]
      %v299 = vld [vmem:[#allocation10 + $0x60] sm:$0xff]
      %v300 = vld [vmem:[#allocation10 + $0x68] sm:$0xff]
      %v301 = vld [vmem:[#allocation10 + $0x70] sm:$0xff]
      %v302 = vld [vmem:[#allocation10 + $0x78] sm:$0xff]
      %303 = vmatprep.subr.mxu0 0.0
      %304 = vmatpush1.msra.mxu0 %v302
      %305 = vmatprep.subr.mxu0 0.0
      %306 = vmatpush1.msra.mxu0 %v301
      %307 = vmatprep.subr.mxu0 0.0
      %308 = vmatpush1.msra.mxu0 %v300
      %309 = vmatprep.subr.mxu0 0.0
      %310 = vmatpush1.msra.mxu0 %v299
      %311 = vmatprep.subr.mxu0 0.0
      %312 = vmatpush1.msra.mxu0 %v298
      %313 = vmatprep.subr.mxu0 0.0
      %314 = vmatpush1.msra.mxu0 %v297
      %315 = vmatprep.subr.mxu0 0.0
      %316 = vmatpush1.msra.mxu0 %v296
      %317 = vmatprep.subr.mxu0 0.0
      %318 = vmatpush1.msra.mxu0 %v295
      %319 = vmatprep.subr.mxu0 0.0
      %320 = vmatpush1.msra.mxu0 %v294
      %321 = vmatprep.subr.mxu0 0.0
      %322 = vmatpush1.msra.mxu0 %v293
      %323 = vmatprep.subr.mxu0 0.0
      %324 = vmatpush1.msra.mxu0 %v292
      %325 = vmatprep.subr.mxu0 0.0
      %326 = vmatpush1.msra.mxu0 %v291
      %327 = vmatprep.subr.mxu0 0.0
      %328 = vmatpush1.msra.mxu0 %v290
      %329 = vmatprep.subr.mxu0 0.0
      %330 = vmatpush1.msra.mxu0 %v289
      %331 = vmatprep.subr.mxu0 0.0
      %332 = vmatpush1.msra.mxu0 %v288
      %333 = vmatprep.subr.mxu0 0.0
      %334 = vmatpush1.msra.mxu0 %v287
      %335 = vmatprep.subr.mxu0 0.0
      %336 = vmatpush2.msra.mxu0 0.0
      %337 = vmatprep.subr.mxu0 0.0
      %338 = vmatpush2.msra.mxu0 0.0
      %339 = vmatprep.subr.mxu0 0.0
      %340 = vmatpush2.msra.mxu0 0.0
      %341 = vmatprep.subr.mxu0 0.0
      %342 = vmatpush2.msra.mxu0 0.0
      %343 = vmatprep.subr.mxu0 0.0
      %344 = vmatpush2.msra.mxu0 0.0
      %345 = vmatprep.subr.mxu0 0.0
      %346 = vmatpush2.msra.mxu0 0.0
      %347 = vmatprep.subr.mxu0 0.0
      %348 = vmatpush2.msra.mxu0 0.0
      %349 = vmatprep.subr.mxu0 0.0
      %350 = vmatpush2.msra.mxu0 0.0
      %351 = vmatprep.subr.mxu0 0.0
      %352 = vmatpush2.msra.mxu0 0.0
      %353 = vmatprep.subr.mxu0 0.0
      %354 = vmatpush2.msra.mxu0 0.0
      %355 = vmatprep.subr.mxu0 0.0
      %356 = vmatpush2.msra.mxu0 0.0
      %357 = vmatprep.subr.mxu0 0.0
      %358 = vmatpush2.msra.mxu0 0.0
      %359 = vmatprep.subr.mxu0 0.0
      %360 = vmatpush2.msra.mxu0 0.0
      %361 = vmatprep.subr.mxu0 0.0
      %362 = vmatpush2.msra.mxu0 0.0
      %363 = vmatprep.subr.mxu0 0.0
      %364 = vmatpush2.msra.mxu0 0.0
      %365 = vmatprep.subr.mxu0 0.0
      %366 = vmatpush2.msra.mxu0 0.0
      %367 = vmatprep.mubr.f32.mxu0 0.0
      %368 = vmatmul.mubr.f32.gmra.mxu0 %v285
      %v369 = vpop.f32.mrf.mxu0
      %v370 = vadd.f32 0.0, %v369
      %v371 = vpop.f32.mrf.mxu0
      %372 = vmatprep.mubr.f32.mxu0 0.0
      %373 = vmatmul.mubr.f32.gmra.mxu0 %v286
      %v374 = vpop.f32.mrf.mxu0
      %v375 = vadd.f32 0.0, %v374
      %v376 = vpop.f32.mrf.mxu0
      %377 = vdwg.mxu0
      %v378 = vld [vmem:[#allocation2] sm:$0xff]
      %v379 = vld [vmem:[#allocation2 + $0x8] sm:$0xff]
      %v380 = vadd.f32 %v378, %v370
      %v381 = vadd.f32 %v379, %v375
      %v382 = vld [vmem:[%s4] sm:$0x1]
      %v384 = vlaneseq
      %v385 = vshrl.u32 %v384, 7
      %v386 = vsub.s32 0, %v385
      %v387 = vrot.slane %v382, %v386
      %v389 = vadd.f32 %v380, %v387
      %v390 = vadd.f32 %v381, %v387
      %391 = vst [vmem:[#allocation12] sm:$0xff] %v389
      %392 = vst [vmem:[#allocation12 + $0x8] sm:$0xff] %v390
    $region45: #{tpu_custom_call.1} parent=1 // pred_fallthru
      _
    // Predicated region
    $region46: #{tpu_custom_call.1} parent=1 // pred_check
      _
    $region47: #{tpu_custom_call.1} parent=1 // pred_check_branch
      %394 = sbr.rel (0) target = $region49
    $region48: #{tpu_custom_call.1} parent=1 // pred_region
      %s396 = ssub.s32 256, 256
      %397 = vsyncadd [#allocation6], %s396
      %s398 = sshll.u32 [#allocation12], 4
      %s399 = int_to_ptr.vmem [resolvable:$true] %s398
      %404 = dma.vmem_to_hbm [thread:$0]  %s399, 256, %s5, [#allocation6], 128, 128, 8
    $region49: #{tpu_custom_call.1} parent=1 // pred_fallthru
      _
    // Predicated region
    $region50: #{tpu_custom_call.1} parent=1 // pred_check
      _
    $region51: #{tpu_custom_call.1} parent=1 // pred_check_branch
      %406 = sbr.rel (0) target = $region53
    $region52: #{tpu_custom_call.1} parent=1 // pred_region
      %407 = dma.done [#allocation6], 256
    $region53: #{tpu_custom_call.1} parent=1 // pred_fallthru
      _
    %408 = vsyncpa [#allocation5], 1
    %409 = vsyncpa [#allocation8], 1
    %410 = vsyncpa [#allocation11], 1
    %411 = vsyncpa [#allocation6], 1

</llo_original>
